<compile_context>
chip_gen: v7x
topology: tpu7x:2x2x1
jax: 0.10.0
libtpu: 0.0.40
codegen_flags: <defaults>
</compile_context>

<pallas_src>
import functools
import math

import jax
import jax.numpy as jnp
from jax.experimental import pallas as pl
from jax.experimental.pallas import tpu as pltpu


# ---------------------------------------------------------------------------
# VMEM budgeting (generation aware)
# ---------------------------------------------------------------------------
def _vmem_budget():
    try:
        cap = int(pltpu.get_tpu_info().vmem_capacity_bytes)
    except Exception:  # pragma: no cover - conservative fallback (covers v7x)
        cap = 64 * 1024 * 1024
    limit = (cap * 3) // 4          # scoped limit handed to the compiler
    work = (limit * 3) // 5         # what we budget for our own blocks
    return limit, work


def _auto_pass1_rows(n, work):
    # Pass 1 footprint ~= 2 double-buffered (TM, n) f32 input blocks = 8*n*TM.
    tm = work // (8 * max(n, 1))
    tm = (tm // 8) * 8
    half = ((n // 2) // 8) * 8      # keep >= 2 blocks for megacore
    if half >= 8:
        tm = min(tm, half)
    tm = max(tm, 8)
    return n if tm >= n else tm


def _auto_block(n, work, symmetric):
    # Pass 2 footprint: non-sym 2*(in+out) = 16*T^2 bytes,
    #                   sym     2*(2 in + out) + transpose temp ~= 28*T^2.
    factor = 28 if symmetric else 16
    t = math.isqrt(max(work // factor, 128 * 128))
    t = (t // 128) * 128
    half = ((n // 2) // 128) * 128  # keep >= 2 row blocks for megacore
    if half >= 128:
        t = min(t, half)
    t = max(t, 128)
    return n if t >= n else t


# ---------------------------------------------------------------------------
# Kernels
# ---------------------------------------------------------------------------
def _rinv_kernel(a_ref, r_ref):
    """Non-symmetric pass 1: r_inv = rsqrt(rowsum(A) + 1), inf -> 0."""
    a = a_ref[...].astype(jnp.float32)                   # (TM, n)
    rowsum = jnp.sum(a, axis=1, keepdims=True) + 1.0     # identity adds exactly 1/row
    r = jax.lax.rsqrt(rowsum)                            # EUP
    r_ref[...] = jnp.where(jnp.isinf(r), 0.0, r)


def _sym_sums_kernel(a_ref, rowsum_ref, colsum_ref, *, tm, n):
    """Symmetric pass 1: per-row-block rowsum(A) + resident colsum(A) accumulator."""
    i = pl.program_id(0)
    a = a_ref[...].astype(jnp.float32)                   # (TM, n)
    if n % tm != 0:
        # Padded tail rows would pollute the column sums -> zero them.
        gr = jax.lax.broadcasted_iota(jnp.int32, a.shape, 0) + i * tm
        a = jnp.where(gr < n, a, 0.0)
    rowsum_ref[...] = jnp.sum(a, axis=1, keepdims=True)

    @pl.when(i == 0)
    def _():
        colsum_ref[...] = jnp.zeros_like(colsum_ref)

    colsum_ref[...] += jnp.sum(a, axis=0, keepdims=True)


def _scale_body(a, rrow_ref, rcol_ref, o_ref, i, j):
    """out = r_row * a * r_col; add r^2 on the diagonal block only (i == j)."""
    rr = rrow_ref[...].astype(jnp.float32)                # (T, 1)
    rc = rcol_ref[...].astype(jnp.float32)                # (1, T)
    o_ref[...] = (rr * a * rc).astype(o_ref.dtype)        # 2 VPU mults / element

    @pl.when(i == j)
    def _():
        # Only G of G^2 blocks pay this; local eye is static (no dynamic slicing).
        t0, t1 = a.shape
        rloc = jax.lax.broadcasted_iota(jnp.int32, (t0, t1), 0)
        cloc = jax.lax.broadcasted_iota(jnp.int32, (t0, t1), 1)
        cur = o_ref[...].astype(jnp.float32)
        o_ref[...] = jnp.where(rloc == cloc, cur + rr * rr, cur).astype(o_ref.dtype)


def _scale_kernel(a_ref, rrow_ref, rcol_ref, o_ref):
    i = pl.program_id(0)
    j = pl.program_id(1)
    _scale_body(a_ref[...].astype(jnp.float32), rrow_ref, rcol_ref, o_ref, i, j)


def _scale_sym_kernel(a_ref, at_ref, rrow_ref, rcol_ref, o_ref):
    i = pl.program_id(0)
    j = pl.program_id(1)
    # Mirrored (j, i) block transposed on the XLU; (A + A^T)/2 never hits HBM.
    a = 0.5 * (a_ref[...].astype(jnp.float32) + at_ref[...].astype(jnp.float32).T)
    _scale_body(a, rrow_ref, rcol_ref, o_ref, i, j)


def _fused_kernel(a_ref, o_ref, *, symmetric):
    """Single-call path for VMEM-resident matrices: 1 read + 1 write of A."""
    a = a_ref[...].astype(jnp.float32)                    # (n, n)
    n = a.shape[0]
    if symmetric:
        a = 0.5 * (a + a.T)
    deg = jnp.sum(a, axis=1, keepdims=True) + 1.0
    r = jax.lax.rsqrt(deg)
    r = jnp.where(jnp.isinf(r), 0.0, r)                   # (n, 1)
    rcol = r.T                                            # (1, n)
    scaled = r * a * rcol
    row = jax.lax.broadcasted_iota(jnp.int32, (n, n), 0)
    col = jax.lax.broadcasted_iota(jnp.int32, (n, n), 1)
    o_ref[...] = jnp.where(row == col, scaled + r * r, scaled).astype(o_ref.dtype)


# ---------------------------------------------------------------------------
# normalize() implementation
# ---------------------------------------------------------------------------
@functools.partial(
    jax.jit,
    static_argnames=("symmetric", "fused", "tm1", "t", "vmem_limit", "out_dtype"),
)
def _normalize_impl(a, *, symmetric, fused, tm1, t, vmem_limit, out_dtype):
    n = a.shape[0]

    if fused:
        return pl.pallas_call(
            functools.partial(_fused_kernel, symmetric=symmetric),
            out_shape=jax.ShapeDtypeStruct((n, n), out_dtype),
            grid=(1,),
            in_specs=[pl.BlockSpec((n, n), lambda i: (0, 0))],
            out_specs=pl.BlockSpec((n, n), lambda i: (0, 0)),
            compiler_params=pltpu.CompilerParams(
                dimension_semantics=("arbitrary",),
                vmem_limit_bytes=vmem_limit,
            ),
        )(a)

    # ---- Pass 1: degree vector (streamed by large row blocks) ---------------
    g1 = pl.cdiv(n, tm1)
    if symmetric:
        rowsum, colsum = pl.pallas_call(
            functools.partial(_sym_sums_kernel, tm=tm1, n=n),
            out_shape=(
                jax.ShapeDtypeStruct((n, 1), jnp.float32),
                jax.ShapeDtypeStruct((1, n), jnp.float32),
            ),
            grid=(g1,),
            in_specs=[pl.BlockSpec((tm1, n), lambda i: (i, 0))],
            out_specs=[
                pl.BlockSpec((tm1, 1), lambda i: (i, 0)),
                pl.BlockSpec((1, n), lambda i: (0, 0)),   # resident accumulator
            ],
            compiler_params=pltpu.CompilerParams(
                dimension_semantics=("arbitrary",),       # accumulator -> sequential
                vmem_limit_bytes=vmem_limit,
            ),
        )(a)
        # Tiny n-element glue in XLA: sym rowsum = (rowsum(A) + colsum(A)) / 2 + 1.
        deg = 0.5 * (rowsum[:, 0] + colsum[0, :]) + 1.0
        r_inv = jax.lax.rsqrt(deg)
        r_inv = jnp.where(jnp.isinf(r_inv), 0.0, r_inv)
        rrow = r_inv.reshape(n, 1)
        rcol = r_inv.reshape(1, n)
    else:
        rrow = pl.pallas_call(
            _rinv_kernel,
            out_shape=jax.ShapeDtypeStruct((n, 1), jnp.float32),
            grid=(g1,),
            in_specs=[pl.BlockSpec((tm1, n), lambda i: (i, 0))],
            out_specs=pl.BlockSpec((tm1, 1), lambda i: (i, 0)),
            compiler_params=pltpu.CompilerParams(
                dimension_semantics=("parallel",),
                vmem_limit_bytes=vmem_limit,
            ),
        )(a)
        rcol = rrow.reshape(1, n)

    # ---- Pass 2: scale (2-D grid of square blocks, lane-dense output) -------
    gi = pl.cdiv(n, t)
    gj = pl.cdiv(n, t)
    cparams = pltpu.CompilerParams(
        dimension_semantics=("parallel", "parallel"),
        vmem_limit_bytes=vmem_limit,
    )
    if symmetric:
        out = pl.pallas_call(
            _scale_sym_kernel,
            out_shape=jax.ShapeDtypeStruct((n, n), out_dtype),
            grid=(gi, gj),
            in_specs=[
                pl.BlockSpec((t, t), lambda i, j: (i, j)),
                pl.BlockSpec((t, t), lambda i, j: (j, i)),   # mirrored block
                pl.BlockSpec((t, 1), lambda i, j: (i, 0)),
                pl.BlockSpec((1, t), lambda i, j: (0, j)),
            ],
            out_specs=pl.BlockSpec((t, t), lambda i, j: (i, j)),
            compiler_params=cparams,
        )(a, a, rrow, rcol)
    else:
        out = pl.pallas_call(
            _scale_kernel,
            out_shape=jax.ShapeDtypeStruct((n, n), out_dtype),
            grid=(gi, gj),
            in_specs=[
                pl.BlockSpec((t, t), lambda i, j: (i, j)),
                pl.BlockSpec((t, 1), lambda i, j: (i, 0)),
                pl.BlockSpec((1, t), lambda i, j: (0, j)),
            ],
            out_specs=pl.BlockSpec((t, t), lambda i, j: (i, j)),
            compiler_params=cparams,
        )(a, rrow, rcol)
    return out


# ---------------------------------------------------------------------------
# Module wrapper
# ---------------------------------------------------------------------------
class EstimateAdj:
    """JAX/Pallas port of tatk.modules.EstimateAdj."""

    def __init__(self, adj, symmetric: bool = False, *,
                 out_dtype=jnp.float32,
                 max_fused_n: int | None = None,
                 pass1_rows: int | None = None,
                 block_size: int | None = None):
        self.estimated_adj = jnp.asarray(adj, dtype=jnp.float32)
        assert self.estimated_adj.ndim == 2
        assert self.estimated_adj.shape[0] == self.estimated_adj.shape[1]
        self.symmetric = bool(symmetric)
        self._out_dtype = out_dtype
        n = self.estimated_adj.shape[0]
        self._n = n

        limit, work = _vmem_budget()
        self._vmem_limit = int(limit)

        if max_fused_n is None:
            # Conservative: assumes double-buffered in/out blocks + value temps.
            max_fused_n = math.isqrt(max(work // 32, 1))
        self._fused = n <= int(max_fused_n)

        if pass1_rows is None:
            pass1_rows = _auto_pass1_rows(n, work)
        if block_size is None:
            block_size = _auto_block(n, work, self.symmetric)
        pass1_rows = min(int(pass1_rows), n)
        block_size = min(int(block_size), n)
        if not self._fused:
            if pass1_rows < n:
                assert pass1_rows % 8 == 0, "pass1_rows must be a multiple of 8 when < n"
            if block_size < n:
                assert block_size % 128 == 0, "block_size must be a multiple of 128 when < n"
        self._tm1 = pass1_rows
        self._t = block_size

    # forward() returns the parameter itself (matches the PyTorch module).
    def forward(self):
        return self.estimated_adj

    __call__ = forward

    def normalize(self):
        return _normalize_impl(
            self.estimated_adj,
            symmetric=self.symmetric,
            fused=self._fused,
            tm1=int(self._tm1),
            t=int(self._t),
            vmem_limit=int(self._vmem_limit),
            out_dtype=self._out_dtype,
        )


# ---------------------------------------------------------------------------
# Pure-JAX reference (mirrors the PyTorch code)
# ---------------------------------------------------------------------------
def _normalize_ref(adj, symmetric):
    a = adj
    if symmetric:
        a = (a + a.T) / 2
    mx = a + jnp.eye(a.shape[0], dtype=a.dtype)
    rowsum = mx.sum(1)
    r_inv = rowsum ** (-0.5)
    r_inv = jnp.where(jnp.isinf(r_inv), 0.0, r_inv)
    r_mat_inv = jnp.diag(r_inv)
    return r_mat_inv @ mx @ r_mat_inv


if __name__ == "__main__":
    def make_adj(key, n):
        raw = (jax.random.uniform(key, (n, n)) < 0.2).astype(jnp.float32)
        return jnp.maximum(raw, raw.T) * (1.0 - jnp.eye(n, dtype=jnp.float32))

    key = jax.random.PRNGKey(0)

    # ---- Fused single-call path (small n) -----------------------------------
    adj64 = make_adj(key, 64)
    module = EstimateAdj(adj64, symmetric=False)
    fwd = jax.block_until_ready(module.forward())
    assert fwd.shape == (64, 64) and fwd.dtype == jnp.float32
    assert jnp.allclose(fwd, module.estimated_adj)

    norm = jax.block_until_ready(module.normalize())
    assert jnp.allclose(norm, _normalize_ref(adj64, False), atol=2e-5, rtol=1e-5)

    module_sym = EstimateAdj(adj64, symmetric=True)
    norm_sym = jax.block_until_ready(module_sym.normalize())
    assert jnp.allclose(norm_sym, _normalize_ref(adj64, True), atol=2e-5, rtol=1e-5)

    # ---- Forced two-pass path (exercises tiled kernels + partial tails) -----
    adj320 = make_adj(jax.random.PRNGKey(0), 320)

    m_np = EstimateAdj(adj320, symmetric=False, max_fused_n=0,
                       pass1_rows=64, block_size=128)
    out_np = jax.block_until_ready(m_np.normalize())
    assert jnp.allclose(out_np, _normalize_ref(adj320, False), atol=2e-5, rtol=1e-5)

    m_sym = EstimateAdj(adj320, symmetric=True, max_fused_n=0,
                        pass1_rows=48, block_size=128)   # 320 % 48 != 0 -> mask path
    out_sym = jax.block_until_ready(m_sym.normalize())
    assert jnp.allclose(out_sym, _normalize_ref(adj320, True), atol=2e-5, rtol=1e-5)

    print("KERNEL_OK")
</pallas_src>

<mosaic_0001>
module attributes {stable_mosaic.version = 11 : i64} {
  func.func @_fused_kernel(%arg0: i32, %arg1: memref<64x64xf32, #tpu.memory_space<vmem>>, %arg2: memref<64x64xf32, #tpu.memory_space<vmem>>) attributes {dimension_semantics = [#tpu.dimension_semantics<arbitrary>], iteration_bounds = array<i64: 1>, scalar_prefetch = 0 : i64, scratch_operands = 0 : i64, tpu.core_type = #tpu.core_type<tc>, window_params = [{pipeline_mode = #tpu.pipeline_mode<synchronous>, transform_indices = @transform_0, window_bounds = array<i64: 64, 64>}, {pipeline_mode = #tpu.pipeline_mode<synchronous>, transform_indices = @transform_1, window_bounds = array<i64: 64, 64>}]} {
    %c0 = arith.constant 0 : index
    %c0_0 = arith.constant 0 : index
    %0 = vector.load %arg1[%c0, %c0_0] : memref<64x64xf32, #tpu.memory_space<vmem>>, vector<64x64xf32>
    %cst = arith.constant dense<0.000000e+00> : vector<64xf32>
    %1 = vector.multi_reduction <add>, %0, %cst [1] : vector<64x64xf32> to vector<64xf32>
    %2 = vector.shape_cast %1 : vector<64xf32> to vector<64x1xf32>
    %cst_1 = arith.constant 1.000000e+00 : f32
    %3 = vector.broadcast %cst_1 : f32 to vector<64x1xf32>
    %4 = arith.addf %2, %3 : vector<64x1xf32>
    %5 = math.rsqrt %4 : vector<64x1xf32>
    %6 = math.absf %5 : vector<64x1xf32>
    %cst_2 = arith.constant 0x7F800000 : f32
    %7 = vector.broadcast %cst_2 : f32 to vector<64x1xf32>
    %8 = arith.cmpf oeq, %6, %7 : vector<64x1xf32>
    %cst_3 = arith.constant 0.000000e+00 : f32
    %9 = vector.broadcast %cst_3 : f32 to vector<64x1xf32>
    %10 = arith.select %8, %9, %5 : vector<64x1xi1>, vector<64x1xf32>
    %11 = tpu.transpose %10, [1, 0] : vector<64x1xf32> -> vector<1x64xf32>
    %12 = vector.broadcast %10 : vector<64x1xf32> to vector<64x64xf32>
    %13 = arith.mulf %12, %0 : vector<64x64xf32>
    %14 = vector.broadcast %11 : vector<1x64xf32> to vector<64x64xf32>
    %15 = arith.mulf %13, %14 : vector<64x64xf32>
    %16 = tpu.iota {dimensions = array<i32: 0>} : vector<64x64xi32>
    %17 = tpu.iota {dimensions = array<i32: 1>} : vector<64x64xi32>
    %18 = arith.cmpi eq, %16, %17 : vector<64x64xi32>
    %19 = arith.mulf %10, %10 : vector<64x1xf32>
    %20 = vector.broadcast %19 : vector<64x1xf32> to vector<64x64xf32>
    %21 = arith.addf %15, %20 : vector<64x64xf32>
    %22 = arith.select %18, %21, %15 : vector<64x64xi1>, vector<64x64xf32>
    %c0_4 = arith.constant 0 : index
    %c0_5 = arith.constant 0 : index
    %23 = vector.load %arg2[%c0_4, %c0_5] : memref<64x64xf32, #tpu.memory_space<vmem>>, vector<64x64xf32>
    tpu.vector_store %arg2[%c0_4, %c0_5], %22 {strides = array<i32>} : memref<64x64xf32, #tpu.memory_space<vmem>>, vector<64x64xf32>,
    return
  }
  func.func @transform_0(%arg0: i32) -> (i32, i32) {
    %c0_i32 = arith.constant 0 : i32
    %c0_i32_0 = arith.constant 0 : i32
    %c0_i32_1 = arith.constant 0 : i32
    return %c0_i32, %c0_i32_0 : i32, i32
  }
  func.func @transform_1(%arg0: i32) -> (i32, i32) {
    %c0_i32 = arith.constant 0 : i32
    %c0_i32_0 = arith.constant 0 : i32
    %c0_i32_1 = arith.constant 0 : i32
    return %c0_i32, %c0_i32_0 : i32, i32
  }
}

</mosaic_0001>

<llo_original>
// kernel: _normalize_impl.1
$region0: #{_normalize_impl.1}
  #allocation0 [shape = 'u32[]', space=smem, size = 0x4, offset = 0x4, fixed_abs, tag = 'smem constant byte address 0x4 - core index']
  #allocation1 [shape = 'u32[144,128]{1,0:T(1,128)}', space=vmem, size = 0x12000, scoped, tag = 'internal scratch']
  %s0 = inlined_call_operand.hbm [shape: f32[64,64], index: 0, kind: input, shape index: {}]
  %s1 = inlined_call_operand.hbm [shape: f32[64,64], index: 1, kind: output, shape index: {}]
  %s2 = sld [smem:[#allocation0]]
  $region18: #{_normalize_impl.1} parent=0
    _
  %s4 = ssub.s32 1, %s2
  %s5 = scalar_select 0, %s4, %s2
  $region1: #{_normalize_impl.1} parent=0
    #allocation2 [shape = 'u8[32768]{0}', space=vmem, size = 0x8000, scoped, tag = 'input window, operand 0, single buffered']
    #allocation3 [shape = 's32[1]{0}', space=sflag, size = 0x4, scoped, tag = 'scoped memory for _normalize_impl.1']
    #allocation4 [shape = 's32[1]{0}', space=sflag, size = 0x4, scoped, tag = 'scoped memory for _normalize_impl.1']
    #allocation5 [shape = 'u8[32768]{0}', space=vmem, size = 0x8000, scoped, tag = 'output window, operand 0, single buffered']
    %6 = vsyncpa [#allocation3], 0
    %7 = vsyncpa [#allocation4], 0
    // Predicated region
    $region2: #{_normalize_impl.1} parent=1 // pred_check
      _
    $region3: #{_normalize_impl.1} parent=1 // pred_check_branch
      %9 = sbr.rel (0) target = $region5
    $region4: #{_normalize_impl.1} parent=1 // pred_region
      %s11 = ssub.s32 1024, 1024
      %12 = vsyncadd [#allocation3], %s11
      %s13 = sshll.u32 [#allocation2], 4
      %s14 = int_to_ptr.vmem [resolvable:$true] %s13
      %19 = dma.hbm_to_vmem [thread:$0]  %s0, 1024, %s14, [#allocation3], 128, 128, 8
    $region5: #{_normalize_impl.1} parent=1 // pred_fallthru
      _
    // Predicated region
    $region6: #{_normalize_impl.1} parent=1 // pred_check
      _
    $region7: #{_normalize_impl.1} parent=1 // pred_check_branch
      %21 = sbr.rel (0) target = $region9
    $region8: #{_normalize_impl.1} parent=1 // pred_region
      %22 = dma.done [#allocation3], 1024
    $region9: #{_normalize_impl.1} parent=1 // pred_fallthru
      _
    %v23 = vld [vmem:[#allocation2] sm:$0xff]
    %v24 = vld [vmem:[#allocation2 + $0x8] sm:$0xff]
    %v25 = vld [vmem:[#allocation2 + $0x10] sm:$0xff]
    %v26 = vld [vmem:[#allocation2 + $0x18] sm:$0xff]
    %v27 = vld [vmem:[#allocation2 + $0x20] sm:$0xff]
    %v28 = vld [vmem:[#allocation2 + $0x28] sm:$0xff]
    %v29 = vld [vmem:[#allocation2 + $0x30] sm:$0xff]
    %v30 = vld [vmem:[#allocation2 + $0x38] sm:$0xff]
    %vm31 = vcmask 523264
    %v32 = vsel %vm31, %v23, 0.0
    %33 = vadd.xlane.f32.xlu0 %v32
    %v34 = vpop.xlane.xlu0 %33
    %v35 = vsel %vm31, %v24, 0.0
    %36 = vadd.xlane.f32.xlu0 %v35
    %v37 = vpop.xlane.xlu0 %36
    %v38 = vsel %vm31, %v25, 0.0
    %39 = vadd.xlane.f32.xlu0 %v38
    %v40 = vpop.xlane.xlu0 %39
    %v41 = vsel %vm31, %v26, 0.0
    %42 = vadd.xlane.f32.xlu0 %v41
    %v43 = vpop.xlane.xlu0 %42
    %v44 = vsel %vm31, %v27, 0.0
    %45 = vadd.xlane.f32.xlu0 %v44
    %v46 = vpop.xlane.xlu0 %45
    %v47 = vsel %vm31, %v28, 0.0
    %48 = vadd.xlane.f32.xlu0 %v47
    %v49 = vpop.xlane.xlu0 %48
    %v50 = vsel %vm31, %v29, 0.0
    %51 = vadd.xlane.f32.xlu0 %v50
    %v52 = vpop.xlane.xlu0 %51
    %v53 = vsel %vm31, %v30, 0.0
    %54 = vadd.xlane.f32.xlu0 %v53
    %v55 = vpop.xlane.xlu0 %54
    %v56 = vadd.f32 %v34, 1.0
    %v57 = vadd.f32 %v37, 1.0
    %v58 = vadd.f32 %v40, 1.0
    %v59 = vadd.f32 %v43, 1.0
    %v60 = vadd.f32 %v46, 1.0
    %v61 = vadd.f32 %v49, 1.0
    %v62 = vadd.f32 %v52, 1.0
    %v63 = vadd.f32 %v55, 1.0
    %v64 = vrsqrt.pop %v56
    %v65 = vrsqrt.pop %v57
    %v66 = vrsqrt.pop %v58
    %v67 = vrsqrt.pop %v59
    %v68 = vrsqrt.pop %v60
    %v69 = vrsqrt.pop %v61
    %v70 = vrsqrt.pop %v62
    %v71 = vrsqrt.pop %v63
    %v72 = vand.u32 2147483647, %v64
    %v73 = vand.u32 2147483647, %v65
    %v74 = vand.u32 2147483647, %v66
    %v75 = vand.u32 2147483647, %v67
    %v76 = vand.u32 2147483647, %v68
    %v77 = vand.u32 2147483647, %v69
    %v78 = vand.u32 2147483647, %v70
    %v79 = vand.u32 2147483647, %v71
    %vm80 = vcmp.eq.f32.partialorder %v72, inf
    %vm81 = vcmp.eq.f32.partialorder %v73, inf
    %vm82 = vcmp.eq.f32.partialorder %v74, inf
    %vm83 = vcmp.eq.f32.partialorder %v75, inf
    %vm84 = vcmp.eq.f32.partialorder %v76, inf
    %vm85 = vcmp.eq.f32.partialorder %v77, inf
    %vm86 = vcmp.eq.f32.partialorder %v78, inf
    %vm87 = vcmp.eq.f32.partialorder %v79, inf
    %v88 = vsel %vm80, 0.0, %v64
    %v89 = vsel %vm81, 0.0, %v65
    %v90 = vsel %vm82, 0.0, %v66
    %v91 = vsel %vm83, 0.0, %v67
    %v92 = vsel %vm84, 0.0, %v68
    %v93 = vsel %vm85, 0.0, %v69
    %v94 = vsel %vm86, 0.0, %v70
    %v95 = vsel %vm87, 0.0, %v71
    %96 = vxpose.xlu0.b32.start [1/16] %v88, 128
    %97 = vxpose.xlu0.b32.cont [2/16] %v89, 128
    %98 = vxpose.xlu0.b32.cont [3/16] %v90, 128
    %99 = vxpose.xlu0.b32.cont [4/16] %v91, 128
    %100 = vxpose.xlu0.b32.cont [5/16] %v92, 128
    %101 = vxpose.xlu0.b32.cont [6/16] %v93, 128
    %102 = vxpose.xlu0.b32.cont [7/16] %v94, 128
    %103 = vxpose.xlu0.b32.cont [8/16] %v95, 128
    %104 = vxpose.xlu0.b32.cont [9/16] 0.0, 128
    %105 = vxpose.xlu0.b32.cont [10/16] 0.0, 128
    %106 = vxpose.xlu0.b32.cont [11/16] 0.0, 128
    %107 = vxpose.xlu0.b32.cont [12/16] 0.0, 128
    %108 = vxpose.xlu0.b32.cont [13/16] 0.0, 128
    %109 = vxpose.xlu0.b32.cont [14/16] 0.0, 128
    %110 = vxpose.xlu0.b32.cont [15/16] 0.0, 128
    %111 = vxpose.xlu0.b32.end [16/16] 0.0, 128
    %v112 = vpop.trf.xlu0
    %v113 = vpop.trf.xlu0
    %v114 = vpop.trf.xlu0
    %v115 = vpop.trf.xlu0
    %v116 = vpop.trf.xlu0
    %v117 = vpop.trf.xlu0
    %v118 = vpop.trf.xlu0
    %v119 = vpop.trf.xlu0
    %v120 = vpop.trf.xlu0
    %v121 = vpop.trf.xlu0
    %v122 = vpop.trf.xlu0
    %v123 = vpop.trf.xlu0
    %v124 = vpop.trf.xlu0
    %v125 = vpop.trf.xlu0
    %v126 = vpop.trf.xlu0
    %v127 = vpop.trf.xlu0
    %v128 = vmul.f32 %v88, %v23
    %v129 = vmul.f32 %v89, %v24
    %v130 = vmul.f32 %v90, %v25
    %v131 = vmul.f32 %v91, %v26
    %v132 = vmul.f32 %v92, %v27
    %v133 = vmul.f32 %v93, %v28
    %v134 = vmul.f32 %v94, %v29
    %v135 = vmul.f32 %v95, %v30
    %v136 = vlaneseq
    %v137 = vshrl.u32 %v136, 7
    %v138 = vsub.s32 0, %v137
    %v139 = vrot.slane %v112, %v138
    %v140 = vmul.f32 %v128, %v139
    %v141 = vmul.f32 %v129, %v139
    %v142 = vmul.f32 %v130, %v139
    %v143 = vmul.f32 %v131, %v139
    %v144 = vmul.f32 %v132, %v139
    %v145 = vmul.f32 %v133, %v139
    %v146 = vmul.f32 %v134, %v139
    %v147 = vmul.f32 %v135, %v139
    %v148 = vlaneseq
    %v149 = vshrl.u32 %v148, 7
    %v150 = vadd.s32 %v149, 8
    %v151 = vadd.s32 %v149, 16
    %v152 = vadd.s32 %v149, 24
    %v153 = vadd.s32 %v149, 32
    %v154 = vadd.s32 %v149, 40
    %v155 = vadd.s32 %v149, 48
    %v156 = vadd.s32 %v149, 56
    %v157 = vlaneseq
    %v158 = vand.u32 %v157, 127
    %vm159 = vcmp.eq.s32.totalorder %v149, %v158
    %vm160 = vcmp.eq.s32.totalorder %v150, %v158
    %vm161 = vcmp.eq.s32.totalorder %v151, %v158
    %vm162 = vcmp.eq.s32.totalorder %v152, %v158
    %vm163 = vcmp.eq.s32.totalorder %v153, %v158
    %vm164 = vcmp.eq.s32.totalorder %v154, %v158
    %vm165 = vcmp.eq.s32.totalorder %v155, %v158
    %vm166 = vcmp.eq.s32.totalorder %v156, %v158
    %v167 = vmul.f32 %v88, %v88
    %v168 = vmul.f32 %v89, %v89
    %v169 = vmul.f32 %v90, %v90
    %v170 = vmul.f32 %v91, %v91
    %v171 = vmul.f32 %v92, %v92
    %v172 = vmul.f32 %v93, %v93
    %v173 = vmul.f32 %v94, %v94
    %v174 = vmul.f32 %v95, %v95
    %v175 = vadd.f32 %v140, %v167
    %v176 = vadd.f32 %v141, %v168
    %v177 = vadd.f32 %v142, %v169
    %v178 = vadd.f32 %v143, %v170
    %v179 = vadd.f32 %v144, %v171
    %v180 = vadd.f32 %v145, %v172
    %v181 = vadd.f32 %v146, %v173
    %v182 = vadd.f32 %v147, %v174
    %v183 = vsel %vm159, %v175, %v140
    %v184 = vsel %vm160, %v176, %v141
    %v185 = vsel %vm161, %v177, %v142
    %v186 = vsel %vm162, %v178, %v143
    %v187 = vsel %vm163, %v179, %v144
    %v188 = vsel %vm164, %v180, %v145
    %v189 = vsel %vm165, %v181, %v146
    %v190 = vsel %vm166, %v182, %v147
    %191 = vst.msk [vmem:[#allocation5] sm:$0xff] %vm31, %v183
    %192 = vst.msk [vmem:[#allocation5 + $0x8] sm:$0xff] %vm31, %v184
    %193 = vst.msk [vmem:[#allocation5 + $0x10] sm:$0xff] %vm31, %v185
    %194 = vst.msk [vmem:[#allocation5 + $0x18] sm:$0xff] %vm31, %v186
    %195 = vst.msk [vmem:[#allocation5 + $0x20] sm:$0xff] %vm31, %v187
    %196 = vst.msk [vmem:[#allocation5 + $0x28] sm:$0xff] %vm31, %v188
    %197 = vst.msk [vmem:[#allocation5 + $0x30] sm:$0xff] %vm31, %v189
    %198 = vst.msk [vmem:[#allocation5 + $0x38] sm:$0xff] %vm31, %v190
    // Predicated region
    $region10: #{_normalize_impl.1} parent=1 // pred_check
      _
    $region11: #{_normalize_impl.1} parent=1 // pred_check_branch
      %200 = sbr.rel (0) target = $region13
    $region12: #{_normalize_impl.1} parent=1 // pred_region
      %s202 = ssub.s32 1024, 1024
      %203 = vsyncadd [#allocation4], %s202
      %s204 = sshll.u32 [#allocation5], 4
      %s205 = int_to_ptr.vmem [resolvable:$true] %s204
      %210 = dma.vmem_to_hbm [thread:$0]  %s205, 1024, %s1, [#allocation4], 128, 128, 8
    $region13: #{_normalize_impl.1} parent=1 // pred_fallthru
      _
    // Predicated region
    $region14: #{_normalize_impl.1} parent=1 // pred_check
      _
    $region15: #{_normalize_impl.1} parent=1 // pred_check_branch
      %212 = sbr.rel (0) target = $region17
    $region16: #{_normalize_impl.1} parent=1 // pred_region
      %213 = dma.done [#allocation4], 1024
    $region17: #{_normalize_impl.1} parent=1 // pred_fallthru
      _
    %214 = vsyncpa [#allocation3], 1
    %215 = vsyncpa [#allocation4], 1

</llo_original>
